<compile_context>
chip_gen: v6e
topology: v6e:2x2x1
jax: 0.10.0
libtpu: 0.0.40
codegen_flags: <defaults>
</compile_context>

<pallas_src>
import jax
import jax.numpy as jnp
from jax.experimental import pallas as pl
from jax.experimental.pallas import tpu as pltpu


def _alias_identity_kernel(x_ref, o_ref):
    # Intentionally empty: o_ref *is* x_ref (input_output_aliases={0: 0}).
    # No data movement, no VMEM DMA, no vld/vst bundle work is emitted.
    pass


def _pallas_identity(x):
    """Zero-copy Pallas identity: output aliases the input HBM buffer."""
    return pl.pallas_call(
        _alias_identity_kernel,
        out_shape=jax.ShapeDtypeStruct(x.shape, x.dtype),
        in_specs=[pl.BlockSpec(memory_space=pl.ANY)],   # raw HBM ref, no auto-DMA
        out_specs=pl.BlockSpec(memory_space=pl.ANY),    # raw HBM ref, no auto-DMA
        input_output_aliases={0: 0},                    # output buffer == input buffer
        cost_estimate=pl.CostEstimate(flops=0, transcendentals=0, bytes_accessed=0),
        compiler_params=pltpu.CompilerParams(),
    )(x)


# Donated so input_output_aliases={0: 0} is satisfied with NO hidden copy:
# the caller's buffer is reused in place.  Without donation XLA would insert
# one full HBM->HBM copy (the entire cost of this op, worst on v5e).
_pallas_identity_donated = jax.jit(_pallas_identity, donate_argnums=0)


def custom_identity(inp, lang, *args, use_pallas_boundary=False, **kwargs):
    """JAX equivalent of CustomIdentity.forward(inp, lang, *args).

    Default: pure pass-through (zero cost, fusible, differentiable) — the
    recommended path per the performance review.  Set use_pallas_boundary=True
    only if an explicit Pallas op boundary is required; the argument is then
    donated, so the caller must not reuse it afterwards.
    """
    del inp, lang, kwargs  # ignored by the original module
    if use_pallas_boundary:
        return _pallas_identity_donated(args[0])
    return args[0]


if __name__ == "__main__":
    key = jax.random.PRNGKey(0)
    k_inp, k_arg = jax.random.split(key)

    # Small shapes consistent with a generic vision-style call:
    # `inp` NCHW, `lang` a token-id sequence, args[0] the tensor passed through.
    inp = jax.random.normal(k_inp, (2, 4, 16, 16), dtype=jnp.float32)
    lang = jnp.arange(8, dtype=jnp.int32)[None, :]          # (1, 8) token ids
    passthrough = jax.random.normal(k_arg, (2, 4, 16, 16), dtype=jnp.float32)

    # --- Default (recommended) path: bare pass-through --------------------
    out = custom_identity(inp, lang, passthrough)
    out = jax.block_until_ready(out)
    assert out.shape == passthrough.shape
    assert out.dtype == passthrough.dtype
    assert bool(jnp.all(out == passthrough))

    # --- Optional Pallas boundary path (zero-copy, donated input) ---------
    pallas_in = jnp.copy(passthrough)  # donated; original kept for comparison
    out_pallas = custom_identity(inp, lang, pallas_in, use_pallas_boundary=True)
    out_pallas = jax.block_until_ready(out_pallas)
    assert out_pallas.shape == passthrough.shape
    assert out_pallas.dtype == passthrough.dtype
    assert bool(jnp.all(out_pallas == passthrough))

    print("KERNEL_OK")
</pallas_src>

<mosaic_0001>
module attributes {stable_mosaic.version = 11 : i64} {
  func.func @_alias_identity_kernel(%arg0: memref<2x4x16x16xf32, #tpu.memory_space<any>>, %arg1: memref<2x4x16x16xf32, #tpu.memory_space<any>>) attributes {dimension_semantics = [], scalar_prefetch = 0 : i64, scratch_operands = 0 : i64, tpu.core_type = #tpu.core_type<tc>} {
    return
  }
}

</mosaic_0001>

<llo_original>
// kernel: _pallas_identity.1
$region0: #{_pallas_identity.1}
  #allocation0 [shape = 'u32[]', space=smem, size = 0x4, offset = 0x4, fixed_abs, tag = 'smem constant byte address 0x4 - core index']
  #allocation1 [shape = 'u32[144,128]{1,0:T(1,128)}', space=vmem, size = 0x12000, scoped, tag = 'internal scratch']
  %s0 = inlined_call_operand.hbm [shape: f32[2,4,16,16], index: 0, kind: input, shape index: {}, may-alias: {0,1}]
  %s1 = inlined_call_operand.hbm [shape: f32[2,4,16,16], index: 1, kind: output, shape index: {}, may-alias: {0,1}]
  %s2 = sld [smem:[#allocation0]]
  $region2: #{_pallas_identity.1} parent=0
    _
  %s4 = ssub.s32 1, %s2
  %s5 = scalar_select 0, %s4, %s2

</llo_original>
